<compile_context>
chip_gen: v6e
topology: v6e:2x2x1
jax: 0.10.0
libtpu: 0.0.40
codegen_flags: <defaults>
</compile_context>

<pallas_src>
import math
import functools

import jax
import jax.numpy as jnp
from jax.experimental import pallas as pl
from jax.experimental.pallas import tpu as pltpu


def mha_kernel(x_ref, wqkv_ref, wproj_ref, bias_ref, o_ref, acc_ref, *,
               n_heads, d_model, inv_scale):
    """Grid = (batch, head). One head of causal attention per step, accumulated
    straight into the projected (T, E) output (no concat)."""
    h = pl.program_id(1)

    @pl.when(h == 0)
    def _init():
        acc_ref[...] = jnp.zeros_like(acc_ref)

    x = x_ref[0]                                    # (T, E) bf16
    T = x.shape[0]

    # Fused Q|K|V projection for this head: (T, E) @ (E, 3D) -> (T, 3D), f32 acc.
    qkv = jnp.dot(x, wqkv_ref[0], preferred_element_type=jnp.float32)
    q = qkv[:, :d_model].astype(jnp.bfloat16)
    k = qkv[:, d_model:2 * d_model].astype(jnp.bfloat16)
    v = qkv[:, 2 * d_model:].astype(jnp.bfloat16)

    # Scores: q @ k^T (contract last dims; bf16 operands, f32 accumulation).
    s = jax.lax.dot_general(q, k, (((1,), (1,)), ((), ())),
                            preferred_element_type=jnp.float32)
    s = s * inv_scale                               # module scales by 1/sqrt(n_embed)

    # Causal mask, regenerated per grid step from iota (cheap VPU work).
    row = jax.lax.broadcasted_iota(jnp.int32, (T, T), 0)
    col = jax.lax.broadcasted_iota(jnp.int32, (T, T), 1)
    s = jnp.where(col <= row, s, jnp.float32(-1e30))

    # Numerically-stable softmax in f32; divide -> EUP reciprocal + 1 Newton step.
    m = jnp.max(s, axis=-1, keepdims=True)
    e = jnp.exp(s - m)
    denom = jnp.sum(e, axis=-1, keepdims=True)
    r = pl.reciprocal(denom, approx=True)
    r = r * (2.0 - denom * r)                       # Newton refinement -> ~f32 accurate
    p = (e * r).astype(jnp.bfloat16)
    # TODO(synk): attention-weight / output dropout omitted (inference, p = 0).

    head_out = jnp.dot(p, v, preferred_element_type=jnp.float32)       # (T, D) f32

    # Accumulate this head's contribution to the output projection:
    #   out += head_out @ Wp.T[h*D:(h+1)*D, :]
    acc_ref[...] += jnp.dot(head_out.astype(jnp.bfloat16), wproj_ref[0],
                            preferred_element_type=jnp.float32)        # (T, E)

    @pl.when(h == n_heads - 1)
    def _finalize():
        o_ref[0] = (acc_ref[...] + bias_ref[...]).astype(o_ref.dtype)


def multi_head_attention(x, wq, wk, wv, wp, bp, *, n_heads, d_model, n_embed):
    B, T, E = x.shape
    assert E == n_embed and n_heads * d_model == n_embed

    # --- wrapper-side layout plumbing (free, outside the kernel) -------------
    # Fused per-head QKV weight, pre-transposed: (H, E, 3*D), columns = [Q | K | V].
    w_qkv = jnp.concatenate(
        [jnp.swapaxes(wq, 1, 2), jnp.swapaxes(wk, 1, 2), jnp.swapaxes(wv, 1, 2)],
        axis=-1)
    # Output projection split per head, pre-transposed: (H, D, E).
    wp_heads = wp.T.reshape(n_heads, d_model, n_embed)

    # bf16 MXU operands (f32 accumulation in-kernel); bias / output stay f32.
    x_bf = x.astype(jnp.bfloat16)
    w_qkv = w_qkv.astype(jnp.bfloat16)
    wp_heads = wp_heads.astype(jnp.bfloat16)

    kernel = functools.partial(
        mha_kernel, n_heads=n_heads, d_model=d_model,
        inv_scale=1.0 / math.sqrt(n_embed))

    flops = B * (2 * T * E * 3 * n_heads * d_model            # fused QKV projections
                 + 2 * n_heads * (2 * T * T * d_model)        # q@k^T and p@v
                 + n_heads * 2 * T * d_model * E)             # per-head output proj
    transcendentals = B * n_heads * T * T                     # softmax exp
    bytes_accessed = (x_bf.size * 2 + w_qkv.size * 2 + wp_heads.size * 2
                      + bp.size * 4 + B * T * E * 4)

    return pl.pallas_call(
        kernel,
        out_shape=jax.ShapeDtypeStruct((B, T, E), jnp.float32),
        grid_spec=pltpu.PrefetchScalarGridSpec(
            num_scalar_prefetch=0,
            grid=(B, n_heads),                                # reduction (head) axis last
            in_specs=[
                pl.BlockSpec((1, T, E), lambda b, h: (b, 0, 0)),            # x (resident per batch)
                pl.BlockSpec((1, E, 3 * d_model), lambda b, h: (h, 0, 0)),  # fused QKV weight
                pl.BlockSpec((1, d_model, E), lambda b, h: (h, 0, 0)),      # per-head proj weight
                pl.BlockSpec((1, E), lambda b, h: (0, 0)),                  # proj bias
            ],
            out_specs=pl.BlockSpec((1, T, E), lambda b, h: (b, 0, 0)),
            scratch_shapes=[pltpu.VMEM((T, E), jnp.float32)],               # f32 accumulator
        ),
        compiler_params=pltpu.CompilerParams(
            dimension_semantics=("parallel", "arbitrary"),
            vmem_limit_bytes=16 * 1024 * 1024),
        cost_estimate=pl.CostEstimate(flops=flops,
                                      transcendentals=transcendentals,
                                      bytes_accessed=bytes_accessed),
    )(x_bf, w_qkv, wp_heads, bp)


def reference_mha(x, wq, wk, wv, wp, bp, *, n_heads, n_embed):
    """Pure-JAX f32 reference matching the PyTorch forward (eval mode)."""
    B, T, E = x.shape
    mask = jnp.tril(jnp.ones((T, T), dtype=bool))
    heads = []
    for h in range(n_heads):
        q = x @ wq[h].T
        k = x @ wk[h].T
        v = x @ wv[h].T
        s = (q @ jnp.swapaxes(k, -1, -2)) / math.sqrt(n_embed)
        s = jnp.where(mask, s, -jnp.inf)
        p = jax.nn.softmax(s, axis=-1)
        heads.append(p @ v)
    cat = jnp.concatenate(heads, axis=-1)
    return cat @ wp.T + bp[0]


if __name__ == "__main__":
    # small shapes consistent with the module: B=2, T=block_size=8,
    # n_heads=4, d_model=8 -> n_embed = 32
    B, T = 2, 8
    n_heads, d_model = 4, 8
    n_embed = n_heads * d_model

    key = jax.random.PRNGKey(0)
    kx, kq, kk, kv, kp, kb = jax.random.split(key, 6)

    x = jax.random.normal(kx, (B, T, n_embed), dtype=jnp.float32)

    # deterministic nn.Linear-style init: U(-1/sqrt(fan_in), 1/sqrt(fan_in))
    lim = 1.0 / math.sqrt(n_embed)
    wq = jax.random.uniform(kq, (n_heads, d_model, n_embed), jnp.float32, -lim, lim)
    wk = jax.random.uniform(kk, (n_heads, d_model, n_embed), jnp.float32, -lim, lim)
    wv = jax.random.uniform(kv, (n_heads, d_model, n_embed), jnp.float32, -lim, lim)
    wp = jax.random.uniform(kp, (n_embed, n_embed), jnp.float32, -lim, lim)
    bp = jax.random.uniform(kb, (1, n_embed), jnp.float32, -lim, lim)

    out = multi_head_attention(x, wq, wk, wv, wp, bp,
                               n_heads=n_heads, d_model=d_model, n_embed=n_embed)
    jax.block_until_ready(out)

    ref = reference_mha(x, wq, wk, wv, wp, bp, n_heads=n_heads, n_embed=n_embed)
    assert out.shape == (B, T, n_embed) and out.dtype == jnp.float32
    # tolerance reflects bf16 MXU operands (f32 accumulation) vs. the pure-f32 reference
    assert jnp.allclose(out, ref, atol=3e-2, rtol=3e-2), "kernel mismatch vs reference"

    print("KERNEL_OK")
</pallas_src>

<mosaic_0001>
module attributes {stable_mosaic.version = 11 : i64} {
  func.func @mha_kernel(%arg0: i32, %arg1: i32, %arg2: memref<1x8x32xbf16, #tpu.memory_space<vmem>>, %arg3: memref<1x32x24xbf16, #tpu.memory_space<vmem>>, %arg4: memref<1x8x32xbf16, #tpu.memory_space<vmem>>, %arg5: memref<1x32xf32, #tpu.memory_space<vmem>>, %arg6: memref<1x8x32xf32, #tpu.memory_space<vmem>>, %arg7: memref<8x32xf32, #tpu.memory_space<vmem>>) attributes {dimension_semantics = [#tpu.dimension_semantics<parallel>, #tpu.dimension_semantics<arbitrary>], iteration_bounds = array<i64: 2, 4>, scalar_prefetch = 0 : i64, scratch_operands = 1 : i64, tpu.core_type = #tpu.core_type<tc>, window_params = [{transform_indices = @transform_0, window_bounds = array<i64: 1, 8, 32>}, {transform_indices = @transform_1, window_bounds = array<i64: 1, 32, 24>}, {transform_indices = @transform_2, window_bounds = array<i64: 1, 8, 32>}, {pipeline_mode = #tpu.pipeline_mode<synchronous>, transform_indices = @transform_3, window_bounds = array<i64: 1, 32>}, {transform_indices = @transform_4, window_bounds = array<i64: 1, 8, 32>}]} {
    %c0_i32 = arith.constant 0 : i32
    %0 = arith.cmpi eq, %arg1, %c0_i32 : i32
    %1 = arith.extui %0 : i1 to i32
    %c0_i32_0 = arith.constant 0 : i32
    %2 = arith.cmpi ne, %1, %c0_i32_0 : i32
    scf.if %2 {
      %cst_22 = arith.constant 0.000000e+00 : f32
      %48 = vector.broadcast %cst_22 : f32 to vector<8x32xf32>
      %c0_23 = arith.constant 0 : index
      %c0_24 = arith.constant 0 : index
      %49 = vector.load %arg7[%c0_23, %c0_24] : memref<8x32xf32, #tpu.memory_space<vmem>>, vector<8x32xf32>
      tpu.vector_store %arg7[%c0_23, %c0_24], %48 {strides = array<i32>} : memref<8x32xf32, #tpu.memory_space<vmem>>, vector<8x32xf32>,
    } else {
    }
    %c0 = arith.constant 0 : index
    %c0_1 = arith.constant 0 : index
    %c0_2 = arith.constant 0 : index
    %3 = vector.load %arg2[%c0, %c0_1, %c0_2] : memref<1x8x32xbf16, #tpu.memory_space<vmem>>, vector<1x8x32xbf16>
    %4 = vector.shape_cast %3 : vector<1x8x32xbf16> to vector<8x32xbf16>
    %c0_3 = arith.constant 0 : index
    %c0_4 = arith.constant 0 : index
    %c0_5 = arith.constant 0 : index
    %5 = vector.load %arg3[%c0_3, %c0_4, %c0_5] : memref<1x32x24xbf16, #tpu.memory_space<vmem>>, vector<1x32x24xbf16>
    %6 = vector.shape_cast %5 : vector<1x32x24xbf16> to vector<32x24xbf16>
    %cst = arith.constant dense<0.000000e+00> : vector<8x24xf32>
    %7 = tpu.matmul %4, %6, %cst {dimension_numbers = #tpu.dot_dimension_numbers<[1], [0], [0], [1], [0, 0, 1, 1], [], []>} : vector<8x32xbf16>, vector<32x24xbf16>, vector<8x24xf32> -> vector<8x24xf32>
    %8 = vector.extract_strided_slice %7 {offsets = [0, 0], sizes = [8, 8], strides = [1, 1]} : vector<8x24xf32> to vector<8x8xf32>
    %9 = arith.truncf %8 : vector<8x8xf32> to vector<8x8xbf16>
    %10 = vector.extract_strided_slice %7 {offsets = [0, 8], sizes = [8, 8], strides = [1, 1]} : vector<8x24xf32> to vector<8x8xf32>
    %11 = arith.truncf %10 : vector<8x8xf32> to vector<8x8xbf16>
    %12 = vector.extract_strided_slice %7 {offsets = [0, 16], sizes = [8, 8], strides = [1, 1]} : vector<8x24xf32> to vector<8x8xf32>
    %13 = arith.truncf %12 : vector<8x8xf32> to vector<8x8xbf16>
    %cst_6 = arith.constant dense<0.000000e+00> : vector<8x8xf32>
    %14 = tpu.matmul %9, %11, %cst_6 {dimension_numbers = #tpu.dot_dimension_numbers<[1], [1], [0], [0], [0, 0, 1, 0], [], []>} : vector<8x8xbf16>, vector<8x8xbf16>, vector<8x8xf32> -> vector<8x8xf32>
    %cst_7 = arith.constant 0.176776692 : f32
    %15 = vector.broadcast %cst_7 : f32 to vector<8x8xf32>
    %16 = arith.mulf %14, %15 : vector<8x8xf32>
    %17 = tpu.iota {dimensions = array<i32: 0>} : vector<8x8xi32>
    %18 = tpu.iota {dimensions = array<i32: 1>} : vector<8x8xi32>
    %19 = arith.cmpi sle, %18, %17 : vector<8x8xi32>
    %cst_8 = arith.constant -1.000000e+30 : f32
    %20 = vector.broadcast %cst_8 : f32 to vector<8x8xf32>
    %21 = arith.select %19, %16, %20 : vector<8x8xi1>, vector<8x8xf32>
    %cst_9 = arith.constant dense<0xFF800000> : vector<8xf32>
    %22 = vector.multi_reduction <maximumf>, %21, %cst_9 [1] : vector<8x8xf32> to vector<8xf32>
    %23 = vector.shape_cast %22 : vector<8xf32> to vector<8x1xf32>
    %24 = vector.broadcast %23 : vector<8x1xf32> to vector<8x8xf32>
    %25 = arith.subf %21, %24 : vector<8x8xf32>
    %26 = math.exp %25 : vector<8x8xf32>
    %cst_10 = arith.constant dense<0.000000e+00> : vector<8xf32>
    %27 = vector.multi_reduction <add>, %26, %cst_10 [1] : vector<8x8xf32> to vector<8xf32>
    %28 = vector.shape_cast %27 : vector<8xf32> to vector<8x1xf32>
    %29 = tpu.reciprocal %28 {approx = true} : vector<8x1xf32> -> vector<8x1xf32>
    %30 = arith.mulf %28, %29 : vector<8x1xf32>
    %cst_11 = arith.constant 2.000000e+00 : f32
    %31 = vector.broadcast %cst_11 : f32 to vector<8x1xf32>
    %32 = arith.subf %31, %30 : vector<8x1xf32>
    %33 = arith.mulf %29, %32 : vector<8x1xf32>
    %34 = vector.broadcast %33 : vector<8x1xf32> to vector<8x8xf32>
    %35 = arith.mulf %26, %34 : vector<8x8xf32>
    %36 = arith.truncf %35 : vector<8x8xf32> to vector<8x8xbf16>
    %cst_12 = arith.constant dense<0.000000e+00> : vector<8x8xf32>
    %37 = tpu.matmul %36, %13, %cst_12 {dimension_numbers = #tpu.dot_dimension_numbers<[1], [0], [0], [1], [0, 0, 1, 1], [], []>} : vector<8x8xbf16>, vector<8x8xbf16>, vector<8x8xf32> -> vector<8x8xf32>
    %c0_13 = arith.constant 0 : index
    %c0_14 = arith.constant 0 : index
    %38 = vector.load %arg7[%c0_13, %c0_14] : memref<8x32xf32, #tpu.memory_space<vmem>>, vector<8x32xf32>
    %39 = arith.truncf %37 : vector<8x8xf32> to vector<8x8xbf16>
    %c0_15 = arith.constant 0 : index
    %c0_16 = arith.constant 0 : index
    %c0_17 = arith.constant 0 : index
    %40 = vector.load %arg4[%c0_15, %c0_16, %c0_17] : memref<1x8x32xbf16, #tpu.memory_space<vmem>>, vector<1x8x32xbf16>
    %41 = vector.shape_cast %40 : vector<1x8x32xbf16> to vector<8x32xbf16>
    %cst_18 = arith.constant dense<0.000000e+00> : vector<8x32xf32>
    %42 = tpu.matmul %39, %41, %cst_18 {dimension_numbers = #tpu.dot_dimension_numbers<[1], [0], [0], [1], [0, 0, 1, 1], [], []>} : vector<8x8xbf16>, vector<8x32xbf16>, vector<8x32xf32> -> vector<8x32xf32>
    %43 = arith.addf %38, %42 : vector<8x32xf32>
    %c0_19 = arith.constant 0 : index
    %c0_20 = arith.constant 0 : index
    %44 = vector.load %arg7[%c0_19, %c0_20] : memref<8x32xf32, #tpu.memory_space<vmem>>, vector<8x32xf32>
    tpu.vector_store %arg7[%c0_19, %c0_20], %43 {strides = array<i32>} : memref<8x32xf32, #tpu.memory_space<vmem>>, vector<8x32xf32>,
    %c3_i32 = arith.constant 3 : i32
    %45 = arith.cmpi eq, %arg1, %c3_i32 : i32
    %46 = arith.extui %45 : i1 to i32
    %c0_i32_21 = arith.constant 0 : i32
    %47 = arith.cmpi ne, %46, %c0_i32_21 : i32
    scf.if %47 {
      %c0_22 = arith.constant 0 : index
      %c0_23 = arith.constant 0 : index
      %48 = vector.load %arg7[%c0_22, %c0_23] : memref<8x32xf32, #tpu.memory_space<vmem>>, vector<8x32xf32>
      %c0_24 = arith.constant 0 : index
      %c0_25 = arith.constant 0 : index
      %49 = vector.load %arg5[%c0_24, %c0_25] : memref<1x32xf32, #tpu.memory_space<vmem>>, vector<1x32xf32>
      %50 = vector.broadcast %49 : vector<1x32xf32> to vector<8x32xf32>
      %51 = arith.addf %48, %50 : vector<8x32xf32>
      %c0_26 = arith.constant 0 : index
      %c0_27 = arith.constant 0 : index
      %c0_28 = arith.constant 0 : index
      %52 = vector.load %arg6[%c0_26, %c0_27, %c0_28] : memref<1x8x32xf32, #tpu.memory_space<vmem>>, vector<1x8x32xf32>
      %53 = vector.shape_cast %52 : vector<1x8x32xf32> to vector<8x32xf32>
      %54 = vector.shape_cast %51 : vector<8x32xf32> to vector<1x8x32xf32>
      tpu.vector_store %arg6[%c0_26, %c0_27, %c0_28], %54 {strides = array<i32>} : memref<1x8x32xf32, #tpu.memory_space<vmem>>, vector<1x8x32xf32>,
    } else {
    }
    return
  }
  func.func @transform_0(%arg0: i32, %arg1: i32) -> (i32, i32, i32) {
    %c0_i32 = arith.constant 0 : i32
    %c0_i32_0 = arith.constant 0 : i32
    %c0_i32_1 = arith.constant 0 : i32
    return %arg0, %c0_i32, %c0_i32_0 : i32, i32, i32
  }
  func.func @transform_1(%arg0: i32, %arg1: i32) -> (i32, i32, i32) {
    %c0_i32 = arith.constant 0 : i32
    %c0_i32_0 = arith.constant 0 : i32
    %c0_i32_1 = arith.constant 0 : i32
    return %arg1, %c0_i32, %c0_i32_0 : i32, i32, i32
  }
  func.func @transform_2(%arg0: i32, %arg1: i32) -> (i32, i32, i32) {
    %c0_i32 = arith.constant 0 : i32
    %c0_i32_0 = arith.constant 0 : i32
    %c0_i32_1 = arith.constant 0 : i32
    return %arg1, %c0_i32, %c0_i32_0 : i32, i32, i32
  }
  func.func @transform_3(%arg0: i32, %arg1: i32) -> (i32, i32) {
    %c0_i32 = arith.constant 0 : i32
    %c0_i32_0 = arith.constant 0 : i32
    %c0_i32_1 = arith.constant 0 : i32
    return %c0_i32, %c0_i32_0 : i32, i32
  }
  func.func @transform_4(%arg0: i32, %arg1: i32) -> (i32, i32, i32) {
    %c0_i32 = arith.constant 0 : i32
    %c0_i32_0 = arith.constant 0 : i32
    %c0_i32_1 = arith.constant 0 : i32
    return %arg0, %c0_i32, %c0_i32_0 : i32, i32, i32
  }
}

</mosaic_0001>

<llo_original>
// kernel: tpu_custom_call.1
$region0: #{tpu_custom_call.1}
  #allocation0 [shape = 'u32[]', space=smem, size = 0x4, offset = 0x4, fixed_abs, tag = 'smem constant byte address 0x4 - core index']
  #allocation1 [shape = 'u32[144,128]{1,0:T(1,128)}', space=vmem, size = 0x12000, scoped, tag = 'internal scratch']
  #allocation2 [shape = 'f32[8,32]{1,0:T(8,128)}', space=vmem, size = 0x1000, scoped, tag = 'scratch operand']
  %s0 = inlined_call_operand.vmem [shape: bf16[2,8,32], index: 0, kind: input, shape index: {}]
  %s1 = inlined_call_operand.vmem [shape: bf16[4,32,24], index: 1, kind: input, shape index: {}]
  %s2 = inlined_call_operand.vmem [shape: bf16[4,8,32], index: 2, kind: input, shape index: {}]
  %s3 = inlined_call_operand.vmem [shape: f32[1,32], index: 3, kind: input, shape index: {}]
  %s4 = inlined_call_operand.hbm [shape: f32[2,8,32], index: 4, kind: output, shape index: {}]
  %s5 = sld [smem:[#allocation0]]
  $region57: #{tpu_custom_call.1} parent=0
    _
  %s7 = ssub.s32 1, %s5
  %s8 = scalar_select 0, %s7, %s5
  $region1: #{tpu_custom_call.1} parent=0
    #allocation3 [shape = 'u8[8192]{0}', space=vmem, size = 0x2000, scoped, tag = 'output window, operand 0']
    #allocation4 [shape = 's32[2]{0}', space=sflag, size = 0x8, scoped, tag = 'scoped memory for tpu_custom_call.1']
    %9 = vsyncpa [#allocation4], 0
    %s10 = scalar_lea.sflag [#allocation4], 1
    %11 = vsyncpa %s10, 0
    loop: start=0, step=1, limit=10
    $region2: #{tpu_custom_call.1} parent=1 // loop_pre_header
      _
    $region3: #{tpu_custom_call.1} parent=1 // loop_header
      %s13 = sphi 0, %s17
      %p14 = scmp.ge.s32.totalorder %s13, 10
      %s20 = sphi 0, %s32
      %s21 = sphi 0, %s28
      %s22 = sphi 0, %s20
      %s23 = sphi 0, %s21
      %s24 = sphi 0, %s22
      %s25 = sphi 0, %s23
      %s35 = sphi 0, %s37
      %s38 = sphi 0, %s35
      %s39 = sphi 0, %s38
      %s55 = sphi 0, %s39
      %s61 = sphi 0, %s63
      %s64 = sphi 0, %s61
      %s65 = sphi 0, %s64
      %s81 = sphi 0, %s65
      %s87 = sphi 0, %s89
      %s90 = sphi 0, %s87
      %s91 = sphi 0, %s90
      %s107 = sphi 0, %s91
      %s111 = sphi 0, %s111
      %s113 = sphi 0, %s111
      %s114 = sphi 0, %s113
      %s128 = sphi 0, %s114
      %s134 = sphi 0, %s136
      %s137 = sphi 0, %s134
      %s138 = sphi 0, %s137
      %s154 = sphi 0, %s138
    $region4: #{tpu_custom_call.1} parent=1 // loop_header_branch
      %16 = sbr.rel (%p14) target = $region8
    $region5: #{tpu_custom_call.1} parent=1 // loop_body
      %s18 = ssub.s32 %s13, 1
      %s19 = ssub.s32 %s13, 2
      %s26 = sadd.s32 1, %s21
      %p27 = scmp.ge.s32.totalorder %s26, 4
      %s28 = scalar_select %p27, 0, %s26
      %s29 = sadd.s32 1, %s20
      %s30 = scalar_select %p27, %s29, %s20
      %p31 = scmp.ge.s32.totalorder %s30, 2
      %s32 = scalar_select %p31, 0, %s30
      %s33 = ssub.s32 %s20, %s32
      %p34 = scmp.eq.s32.totalorder %s33, 0
      %s36 = sadd.s32 %s35, 1
      %s37 = scalar_select %p34, %s35, %s36
      %p40 = pneg %p34
      %p41 = scmp.eq.s32.totalorder %s13, 7
      %p42 = por %p40, %p41
      %p43 = scmp.ne.s32.totalorder %s35, %s38
      %p44 = scmp.eq.s32.totalorder %s13, 0
      %p45 = por %p43, %p44
      %p46 = scmp.ne.s32.totalorder %s35, %s38
      %p47 = scmp.eq.s32.totalorder %s18, 7
      %p48 = por %p46, %p47
      %p49 = scmp.ne.s32.totalorder %s38, %s39
      %p50 = scmp.eq.s32.totalorder %s18, 0
      %p51 = por %p49, %p50
      %p52 = scmp.ne.s32.totalorder %s38, %s39
      %p53 = scmp.eq.s32.totalorder %s19, 7
      %p54 = por %p52, %p53
      %p56 = scmp.ne.s32.totalorder %s39, %s55
      %p57 = scmp.eq.s32.totalorder %s19, 0
      %p58 = por %p56, %p57
      %s59 = ssub.s32 %s21, %s28
      %p60 = scmp.eq.s32.totalorder %s59, 0
      %s62 = sadd.s32 %s61, 1
      %s63 = scalar_select %p60, %s61, %s62
      %p66 = pneg %p60
      %p67 = scmp.eq.s32.totalorder %s13, 7
      %p68 = por %p66, %p67
      %p69 = scmp.ne.s32.totalorder %s61, %s64
      %p70 = scmp.eq.s32.totalorder %s13, 0
      %p71 = por %p69, %p70
      %p72 = scmp.ne.s32.totalorder %s61, %s64
      %p73 = scmp.eq.s32.totalorder %s18, 7
      %p74 = por %p72, %p73
      %p75 = scmp.ne.s32.totalorder %s64, %s65
      %p76 = scmp.eq.s32.totalorder %s18, 0
      %p77 = por %p75, %p76
      %p78 = scmp.ne.s32.totalorder %s64, %s65
      %p79 = scmp.eq.s32.totalorder %s19, 7
      %p80 = por %p78, %p79
      %p82 = scmp.ne.s32.totalorder %s65, %s81
      %p83 = scmp.eq.s32.totalorder %s19, 0
      %p84 = por %p82, %p83
      %s85 = ssub.s32 %s21, %s28
      %p86 = scmp.eq.s32.totalorder %s85, 0
      %s88 = sadd.s32 %s87, 1
      %s89 = scalar_select %p86, %s87, %s88
      %p92 = pneg %p86
      %p93 = scmp.eq.s32.totalorder %s13, 7
      %p94 = por %p92, %p93
      %p95 = scmp.ne.s32.totalorder %s87, %s90
      %p96 = scmp.eq.s32.totalorder %s13, 0
      %p97 = por %p95, %p96
      %p98 = scmp.ne.s32.totalorder %s87, %s90
      %p99 = scmp.eq.s32.totalorder %s18, 7
      %p100 = por %p98, %p99
      %p101 = scmp.ne.s32.totalorder %s90, %s91
      %p102 = scmp.eq.s32.totalorder %s18, 0
      %p103 = por %p101, %p102
      %p104 = scmp.ne.s32.totalorder %s90, %s91
      %p105 = scmp.eq.s32.totalorder %s19, 7
      %p106 = por %p104, %p105
      %p108 = scmp.ne.s32.totalorder %s91, %s107
      %p109 = scmp.eq.s32.totalorder %s19, 0
      %p110 = por %p108, %p109
      %s112 = sadd.s32 %s111, 1
      %p115 = scmp.eq.s32.totalorder %s13, 7
      %p116 = scmp.ne.s32.totalorder %s111, %s113
      %p117 = scmp.eq.s32.totalorder %s13, 0
      %p118 = por %p116, %p117
      %p119 = scmp.ne.s32.totalorder %s111, %s113
      %p120 = scmp.eq.s32.totalorder %s18, 7
      %p121 = por %p119, %p120
      %p122 = scmp.ne.s32.totalorder %s113, %s114
      %p123 = scmp.eq.s32.totalorder %s18, 0
      %p124 = por %p122, %p123
      %p125 = scmp.ne.s32.totalorder %s113, %s114
      %p126 = scmp.eq.s32.totalorder %s19, 7
      %p127 = por %p125, %p126
      %p129 = scmp.ne.s32.totalorder %s114, %s128
      %p130 = scmp.eq.s32.totalorder %s19, 0
      %p131 = por %p129, %p130
      %s132 = ssub.s32 %s20, %s32
      %p133 = scmp.eq.s32.totalorder %s132, 0
      %s135 = sadd.s32 %s134, 1
      %s136 = scalar_select %p133, %s134, %s135
      %p139 = pneg %p133
      %p140 = scmp.eq.s32.totalorder %s13, 7
      %p141 = por %p139, %p140
      %p142 = scmp.ne.s32.totalorder %s134, %s137
      %p143 = scmp.eq.s32.totalorder %s13, 0
      %p144 = por %p142, %p143
      %p145 = scmp.ne.s32.totalorder %s134, %s137
      %p146 = scmp.eq.s32.totalorder %s18, 7
      %p147 = por %p145, %p146
      %p148 = scmp.ne.s32.totalorder %s137, %s138
      %p149 = scmp.eq.s32.totalorder %s18, 0
      %p150 = por %p148, %p149
      %p151 = scmp.ne.s32.totalorder %s137, %s138
      %p152 = scmp.eq.s32.totalorder %s19, 7
      %p153 = por %p151, %p152
      %p155 = scmp.ne.s32.totalorder %s138, %s154
      %p156 = scmp.eq.s32.totalorder %s19, 0
      %p157 = por %p155, %p156
      %p158 = scmp.le.s32.totalorder 1, %s13
      %p159 = scmp.lt.s32.totalorder %s13, 9
      %p160 = pnand %p158, %p159
      %p161 = pneg %p160
      // Predicated region
      $region9: #{tpu_custom_call.1} parent=5 // pred_check
        _
      $region10: #{tpu_custom_call.1} parent=5 // pred_check_branch
        %163 = sbr.rel (%p160) target = $region12
      $region11: #{tpu_custom_call.1} parent=5 // pred_region
        %s164 = ssub.s32 %s13, 1
        // Predicated region
        $region13: #{tpu_custom_call.1} parent=11 // pred_check
          %p165 = pneg %p124
        $region14: #{tpu_custom_call.1} parent=11 // pred_check_branch
          %167 = sbr.rel (%p165) target = $region16
        $region15: #{tpu_custom_call.1} parent=11 // pred_region
          _
        $region16: #{tpu_custom_call.1} parent=11 // pred_fallthru
          _
      $region12: #{tpu_custom_call.1} parent=5 // pred_fallthru
        _
      %p168 = scmp.lt.s32.totalorder %s13, 8
      // Predicated region
      $region17: #{tpu_custom_call.1} parent=5 // pred_check
        %p169 = pneg %p168
      $region18: #{tpu_custom_call.1} parent=5 // pred_check_branch
        %171 = sbr.rel (%p169) target = $region20
      $region19: #{tpu_custom_call.1} parent=5 // pred_region
        // Predicated region
        $region21: #{tpu_custom_call.1} parent=19 // pred_check
          %p172 = pneg %p45
        $region22: #{tpu_custom_call.1} parent=19 // pred_check_branch
          %174 = sbr.rel (%p172) target = $region24
        $region23: #{tpu_custom_call.1} parent=19 // pred_region
          %p175 = scmp.lt.s32.totalorder %s20, 1
          %s176 = scalar_select %p175, %s20, 1
          %s177 = smul.addr %s176, 4
          %s178 = scalar_lea.vmem %s0, %s177
        $region24: #{tpu_custom_call.1} parent=19 // pred_fallthru
          _
        // Predicated region
        $region25: #{tpu_custom_call.1} parent=19 // pred_check
          %p179 = pneg %p71
        $region26: #{tpu_custom_call.1} parent=19 // pred_check_branch
          %181 = sbr.rel (%p179) target = $region28
        $region27: #{tpu_custom_call.1} parent=19 // pred_region
          %p182 = scmp.lt.s32.totalorder %s21, 3
          %s183 = scalar_select %p182, %s21, 3
          %s184 = smul.addr %s183, 4
          %s185 = smul.addr %s184, 4
          %s186 = scalar_lea.vmem %s1, %s185
        $region28: #{tpu_custom_call.1} parent=19 // pred_fallthru
          _
        // Predicated region
        $region29: #{tpu_custom_call.1} parent=19 // pred_check
          %p187 = pneg %p97
        $region30: #{tpu_custom_call.1} parent=19 // pred_check_branch
          %189 = sbr.rel (%p187) target = $region32
        $region31: #{tpu_custom_call.1} parent=19 // pred_region
          %p190 = scmp.lt.s32.totalorder %s21, 3
          %s191 = scalar_select %p190, %s21, 3
          %s192 = smul.addr %s191, 4
          %s193 = scalar_lea.vmem %s2, %s192
        $region32: #{tpu_custom_call.1} parent=19 // pred_fallthru
          _
      $region20: #{tpu_custom_call.1} parent=5 // pred_fallthru
        _
      %p194 = scmp.le.s32.totalorder 1, %s13
      %p195 = scmp.lt.s32.totalorder %s13, 9
      %p196 = pnand %p194, %p195
      %p197 = pneg %p196
      // Predicated region
      $region33: #{tpu_custom_call.1} parent=5 // pred_check
        _
      $region34: #{tpu_custom_call.1} parent=5 // pred_check_branch
        %199 = sbr.rel (%p196) target = $region36
      $region35: #{tpu_custom_call.1} parent=5 // pred_region
        %s200 = ssub.s32 %s13, 1
        %p201 = scmp.lt.s32.totalorder %s22, 1
        %s202 = scalar_select %p201, %s22, 1
        %s203 = smul.addr %s202, 4
        %s204 = scalar_lea.vmem %s0, %s203
        %p205 = pneg %p51
        %p206 = pneg %p48
        %p207 = scmp.lt.s32.totalorder %s23, 3
        %s208 = scalar_select %p207, %s23, 3
        %s209 = smul.addr %s208, 4
        %s210 = smul.addr %s209, 4
        %s211 = scalar_lea.vmem %s1, %s210
        %p212 = pneg %p77
        %p213 = pneg %p74
        %p214 = scmp.lt.s32.totalorder %s23, 3
        %s215 = scalar_select %p214, %s23, 3
        %s216 = smul.addr %s215, 4
        %s217 = scalar_lea.vmem %s2, %s216
        %p218 = pneg %p103
        %p219 = pneg %p100
        %p220 = pneg %p124
        %p221 = pneg %p121
        %p222 = pneg %p150
        %p223 = pneg %p147
        %s224 = sand.u32 %s137, 1
        %s225 = scalar_lea.sflag [#allocation4], %s224
        %s226 = sand.u32 %s137, 1
        %s227 = smul.addr %s226, 8
        %s228 = scalar_lea.vmem [#allocation3], %s227
        %p229 = scmp.lt.s32.totalorder %s22, 1
        %s230 = scalar_select %p229, %s22, 1
        %s231 = smul.addr %s230, 4
        %s232 = scalar_lea.vmem %s0, %s231
        %p233 = scmp.lt.s32.totalorder %s23, 3
        %s234 = scalar_select %p233, %s23, 3
        %s235 = smul.addr %s234, 4
        %s236 = smul.addr %s235, 4
        %s237 = scalar_lea.vmem %s1, %s236
        %p238 = scmp.lt.s32.totalorder %s23, 3
        %s239 = scalar_select %p238, %s23, 3
        %s240 = smul.addr %s239, 4
        %s241 = scalar_lea.vmem %s2, %s240
        %p243 = scmp.eq.s32.totalorder %s23, 0
        // Predicated region
        $region37: #{tpu_custom_call.1} parent=35 // pred_check
          %p244 = pneg %p243
        $region38: #{tpu_custom_call.1} parent=35 // pred_check_branch
          %246 = sbr.rel (%p244) target = $region40
        $region39: #{tpu_custom_call.1} parent=35 // pred_region
          %vm247 = vcmask 261120
          %248 = vst.msk [vmem:[#allocation2] sm:$0xff] %vm247, 0.0
        $region40: #{tpu_custom_call.1} parent=35 // pred_fallthru
          _
        %v249 = vld [vmem:[%s232] sm:$0xf]
        %v250 = vld [vmem:[%s237] sm:$0xf]
        %v251 = vld [vmem:[%s237 + $0x4] sm:$0xf]
        %v252 = vld [vmem:[%s237 + $0x8] sm:$0xf]
        %v253 = vld [vmem:[%s237 + $0xc] sm:$0xf]
        %v258 = vunpack.c.l.b16 %v250
        %v259 = vunpack.c.l.b16 %v251
        %v260 = vunpack.c.l.b16 %v252
        %v261 = vunpack.c.l.b16 %v253
        %v262 = vpack.c.b16 %v259, %v258
        %v263 = vpack.c.b16 %v261, %v260
        %vm266 = vcmask 261120
        %v268 = vsel %vm266, %v249, 0
        %270 = vmatprep.subr.bf16.mxu0 0
        %271 = vmatpush1.bf16.msra.mxu0 0
        %272 = vmatprep.subr.bf16.mxu0 0
        %273 = vmatpush1.bf16.msra.mxu0 0
        %274 = vmatprep.subr.bf16.mxu0 0
        %275 = vmatpush1.bf16.msra.mxu0 0
        %276 = vmatprep.subr.bf16.mxu0 0
        %277 = vmatpush1.bf16.msra.mxu0 0
        %278 = vmatprep.subr.bf16.mxu0 0
        %279 = vmatpush1.bf16.msra.mxu0 0
        %280 = vmatprep.subr.bf16.mxu0 0
        %281 = vmatpush1.bf16.msra.mxu0 0
        %282 = vmatprep.subr.bf16.mxu0 0
        %283 = vmatpush1.bf16.msra.mxu0 %v263
        %284 = vmatprep.subr.bf16.mxu0 0
        %285 = vmatpush1.bf16.msra.mxu0 %v262
        %286 = vmatprep.subr.bf16.mxu0 0
        %287 = vmatpush2.bf16.msra.mxu0 0
        %288 = vmatprep.subr.bf16.mxu0 0
        %289 = vmatpush2.bf16.msra.mxu0 0
        %290 = vmatprep.subr.bf16.mxu0 0
        %291 = vmatpush2.bf16.msra.mxu0 0
        %292 = vmatprep.subr.bf16.mxu0 0
        %293 = vmatpush2.bf16.msra.mxu0 0
        %294 = vmatprep.subr.bf16.mxu0 0
        %295 = vmatpush2.bf16.msra.mxu0 0
        %296 = vmatprep.subr.bf16.mxu0 0
        %297 = vmatpush2.bf16.msra.mxu0 0
        %298 = vmatprep.subr.bf16.mxu0 0
        %299 = vmatpush2.bf16.msra.mxu0 0
        %300 = vmatprep.subr.bf16.mxu0 0
        %301 = vmatpush2.bf16.msra.mxu0 0
        %302 = vmatprep.mubr.bf16.mxu0 0
        %303 = vmatmul.mubr.bf16.gmra.mxu0 %v268
        %v304 = vpop.f32.mrf.mxu0
        %v305 = vadd.f32 0.0, %v304
        %v306 = vpop.f32.mrf.mxu0
        %v307 = vpop.f32.mrf.mxu0
        %v308 = vpop.f32.mrf.mxu0
        %309 = vdwg.mxu0
        %v310 = vpack.c.bf16 %v305, %v305
        %312 = vrot.lane.b32.xlu0 %v310, 120
        %v313 = vpop.permute.xlu0 %312
        %vm314 = vcmask 64512
        %v316 = vsel %vm314, %v310, 0
        %v319 = vsel %vm314, %v313, 0
        %321 = vmatprep.subr.bf16.mxu0 0
        %322 = vmatpush1.bf16.xpose.msra.mxu0 0
        %323 = vmatprep.subr.bf16.mxu0 0
        %324 = vmatpush1.bf16.xpose.msra.mxu0 0
        %325 = vmatprep.subr.bf16.mxu0 0
        %326 = vmatpush1.bf16.xpose.msra.mxu0 0
        %327 = vmatprep.subr.bf16.mxu0 0
        %328 = vmatpush1.bf16.xpose.msra.mxu0 0
        %329 = vmatprep.subr.bf16.mxu0 0
        %330 = vmatpush1.bf16.xpose.msra.mxu0 0
        %331 = vmatprep.subr.bf16.mxu0 0
        %332 = vmatpush1.bf16.xpose.msra.mxu0 0
        %333 = vmatprep.subr.bf16.mxu0 0
        %334 = vmatpush1.bf16.xpose.msra.mxu0 0
        %335 = vmatprep.subr.bf16.mxu0 0
        %336 = vmatpush1.bf16.xpose.msra.mxu0 %v319
        %337 = vmatprep.subr.bf16.mxu0 0
        %338 = vmatpush2.bf16.xpose.msra.mxu0 0
        %339 = vmatprep.subr.bf16.mxu0 0
        %340 = vmatpush2.bf16.xpose.msra.mxu0 0
        %341 = vmatprep.subr.bf16.mxu0 0
        %342 = vmatpush2.bf16.xpose.msra.mxu0 0
        %343 = vmatprep.subr.bf16.mxu0 0
        %344 = vmatpush2.bf16.xpose.msra.mxu0 0
        %345 = vmatprep.subr.bf16.mxu0 0
        %346 = vmatpush2.bf16.xpose.msra.mxu0 0
        %347 = vmatprep.subr.bf16.mxu0 0
        %348 = vmatpush2.bf16.xpose.msra.mxu0 0
        %349 = vmatprep.subr.bf16.mxu0 0
        %350 = vmatpush2.bf16.xpose.msra.mxu0 0
        %351 = vmatprep.subr.bf16.mxu0 0
        %352 = vmatpush2.bf16.xpose.msra.mxu0 0
        %353 = vmatprep.mubr.bf16.mxu0 0
        %354 = vmatmul.mubr.bf16.gmra.mxu0 %v316
        %v355 = vpop.f32.mrf.mxu0
        %v356 = vadd.f32 0.0, %v355
        %v357 = vpop.f32.mrf.mxu0
        %v358 = vpop.f32.mrf.mxu0
        %v359 = vpop.f32.mrf.mxu0
        %360 = vdwg.mxu0
        %v361 = vmul.f32 %v356, 0.17677669
        %v362 = vlaneseq
        %v363 = vshrl.u32 %v362, 7
        %v364 = vlaneseq
        %v365 = vand.u32 %v364, 127
        %vm366 = vcmp.le.s32.totalorder %v365, %v363
        %v367 = vsel %vm366, %v361, -1e+30
        %v368 = vsel %vm314, %v367, -inf
        %369 = vmax.xlane.f32.xlu0 %v368
        %v370 = vpop.xlane.xlu0 %369
        %v371 = vsub.f32 %v367, %v370
        %v372 = vmul.f32 %v371, 1.442695
        %v373 = vpow.pop %v372
        %v374 = vsel %vm314, %v373, 0.0
        %375 = vadd.xlane.f32.xlu0 %v374
        %v376 = vpop.xlane.xlu0 %375
        %v377 = vrcp.pop %v376
        %v378 = vmul.f32 %v376, %v377
        %v379 = vsub.f32 2.0, %v378
        %v380 = vmul.f32 %v377, %v379
        %v381 = vmul.f32 %v373, %v380
        %v382 = vpack.c.bf16 %v381, %v381
        %383 = vrot.lane.b32.xlu0 %v310, 112
        %v384 = vpop.permute.xlu0 %383
        %v386 = vsel %vm314, %v382, 0
        %vm388 = vcmask 1043456
        %v390 = vsel %vm388, %v384, 0
        %392 = vmatprep.subr.bf16.mxu0 0
        %393 = vmatpush1.bf16.msra.mxu0 0
        %394 = vmatprep.subr.bf16.mxu0 0
        %395 = vmatpush1.bf16.msra.mxu0 0
        %396 = vmatprep.subr.bf16.mxu0 0
        %397 = vmatpush1.bf16.msra.mxu0 0
        %398 = vmatprep.subr.bf16.mxu0 0
        %399 = vmatpush1.bf16.msra.mxu0 0
        %400 = vmatprep.subr.bf16.mxu0 0
        %401 = vmatpush1.bf16.msra.mxu0 0
        %402 = vmatprep.subr.bf16.mxu0 0
        %403 = vmatpush1.bf16.msra.mxu0 0
        %404 = vmatprep.subr.bf16.mxu0 0
        %405 = vmatpush1.bf16.msra.mxu0 0
        %406 = vmatprep.subr.bf16.mxu0 0
        %407 = vmatpush1.bf16.msra.mxu0 %v390
        %408 = vmatprep.subr.bf16.mxu0 0
        %409 = vmatpush2.bf16.msra.mxu0 0
        %410 = vmatprep.subr.bf16.mxu0 0
        %411 = vmatpush2.bf16.msra.mxu0 0
        %412 = vmatprep.subr.bf16.mxu0 0
        %413 = vmatpush2.bf16.msra.mxu0 0
        %414 = vmatprep.subr.bf16.mxu0 0
        %415 = vmatpush2.bf16.msra.mxu0 0
        %416 = vmatprep.subr.bf16.mxu0 0
        %417 = vmatpush2.bf16.msra.mxu0 0
        %418 = vmatprep.subr.bf16.mxu0 0
        %419 = vmatpush2.bf16.msra.mxu0 0
        %420 = vmatprep.subr.bf16.mxu0 0
        %421 = vmatpush2.bf16.msra.mxu0 0
        %422 = vmatprep.subr.bf16.mxu0 0
        %423 = vmatpush2.bf16.msra.mxu0 0
        %424 = vmatprep.mubr.bf16.mxu0 0
        %425 = vmatmul.mubr.bf16.gmra.mxu0 %v386
        %v426 = vpop.f32.mrf.mxu0
        %v427 = vadd.f32 0.0, %v426
        %v428 = vpop.f32.mrf.mxu0
        %v429 = vpop.f32.mrf.mxu0
        %v430 = vpop.f32.mrf.mxu0
        %431 = vdwg.mxu0
        %v432 = vld [vmem:[#allocation2] sm:$0xff]
        %v433 = vpack.c.bf16 %v427, %v427
        %v434 = vld [vmem:[%s241] sm:$0xf]
        %v436 = vsel %vm314, %v433, 0
        %v439 = vsel %vm388, %v434, 0
        %441 = vmatprep.subr.bf16.mxu0 0
        %442 = vmatpush1.bf16.msra.mxu0 0
        %443 = vmatprep.subr.bf16.mxu0 0
        %444 = vmatpush1.bf16.msra.mxu0 0
        %445 = vmatprep.subr.bf16.mxu0 0
        %446 = vmatpush1.bf16.msra.mxu0 0
        %447 = vmatprep.subr.bf16.mxu0 0
        %448 = vmatpush1.bf16.msra.mxu0 0
        %449 = vmatprep.subr.bf16.mxu0 0
        %450 = vmatpush1.bf16.msra.mxu0 0
        %451 = vmatprep.subr.bf16.mxu0 0
        %452 = vmatpush1.bf16.msra.mxu0 0
        %453 = vmatprep.subr.bf16.mxu0 0
        %454 = vmatpush1.bf16.msra.mxu0 0
        %455 = vmatprep.subr.bf16.mxu0 0
        %456 = vmatpush1.bf16.msra.mxu0 %v439
        %457 = vmatprep.subr.bf16.mxu0 0
        %458 = vmatpush2.bf16.msra.mxu0 0
        %459 = vmatprep.subr.bf16.mxu0 0
        %460 = vmatpush2.bf16.msra.mxu0 0
        %461 = vmatprep.subr.bf16.mxu0 0
        %462 = vmatpush2.bf16.msra.mxu0 0
        %463 = vmatprep.subr.bf16.mxu0 0
        %464 = vmatpush2.bf16.msra.mxu0 0
        %465 = vmatprep.subr.bf16.mxu0 0
        %466 = vmatpush2.bf16.msra.mxu0 0
        %467 = vmatprep.subr.bf16.mxu0 0
        %468 = vmatpush2.bf16.msra.mxu0 0
        %469 = vmatprep.subr.bf16.mxu0 0
        %470 = vmatpush2.bf16.msra.mxu0 0
        %471 = vmatprep.subr.bf16.mxu0 0
        %472 = vmatpush2.bf16.msra.mxu0 0
        %473 = vmatprep.mubr.bf16.mxu0 0
        %474 = vmatmul.mubr.bf16.gmra.mxu0 %v436
        %v475 = vpop.f32.mrf.mxu0
        %v476 = vadd.f32 0.0, %v475
        %v477 = vpop.f32.mrf.mxu0
        %v478 = vpop.f32.mrf.mxu0
        %v479 = vpop.f32.mrf.mxu0
        %480 = vdwg.mxu0
        %v481 = vadd.f32 %v432, %v476
        %482 = vst.msk [vmem:[#allocation2] sm:$0xff] %vm266, %v481
        %p483 = scmp.eq.s32.totalorder %s23, 3
        // Predicated region
        $region41: #{tpu_custom_call.1} parent=35 // pred_check
          %p484 = pneg %p483
        $region42: #{tpu_custom_call.1} parent=35 // pred_check_branch
          %486 = sbr.rel (%p484) target = $region44
        $region43: #{tpu_custom_call.1} parent=35 // pred_region
          %v487 = vld [vmem:[#allocation2] sm:$0xff]
          %v488 = vld [vmem:[%s3] sm:$0x1]
          %v490 = vlaneseq
          %v491 = vshrl.u32 %v490, 7
          %v492 = vsub.s32 0, %v491
          %v493 = vrot.slane %v488, %v492
          %v495 = vadd.f32 %v487, %v493
          %496 = vst.msk [vmem:[%s228] sm:$0xff] %vm266, %v495
        $region44: #{tpu_custom_call.1} parent=35 // pred_fallthru
          _
        %s497 = sand.u32 %s137, 1
        %s498 = scalar_lea.sflag [#allocation4], %s497
        %s499 = sand.u32 %s137, 1
        %s500 = smul.addr %s499, 8
        %s501 = scalar_lea.vmem [#allocation3], %s500
        // Predicated region
        $region45: #{tpu_custom_call.1} parent=35 // pred_check
          %p502 = pneg %p147
        $region46: #{tpu_custom_call.1} parent=35 // pred_check_branch
          %504 = sbr.rel (%p502) target = $region48
        $region47: #{tpu_custom_call.1} parent=35 // pred_region
          %s506 = ssub.s32 128, 128
          %507 = vsyncadd %s498, %s506
          %s508 = smul.addr %s22, 128
          %s509 = scalar_lea.hbm %s4, %s508
          %s511 = sshll.u32 %s501, 4
          %s512 = int_to_ptr.vmem [resolvable:$true] %s511
          %514 = dma.vmem_to_hbm [thread:$0]  %s512, 128, %s509, %s498
        $region48: #{tpu_custom_call.1} parent=35 // pred_fallthru
          _
      $region36: #{tpu_custom_call.1} parent=5 // pred_fallthru
        _
      %p515 = scmp.le.s32.totalorder 2, %s13
      // Predicated region
      $region49: #{tpu_custom_call.1} parent=5 // pred_check
        %p516 = pneg %p515
      $region50: #{tpu_custom_call.1} parent=5 // pred_check_branch
        %518 = sbr.rel (%p516) target = $region52
      $region51: #{tpu_custom_call.1} parent=5 // pred_region
        %s519 = ssub.s32 %s13, 2
        // Predicated region
        $region53: #{tpu_custom_call.1} parent=51 // pred_check
          %p520 = pneg %p153
        $region54: #{tpu_custom_call.1} parent=51 // pred_check_branch
          %522 = sbr.rel (%p520) target = $region56
        $region55: #{tpu_custom_call.1} parent=51 // pred_region
          %s523 = sand.u32 %s138, 1
          %s524 = scalar_lea.sflag [#allocation4], %s523
          %s525 = sand.u32 %s138, 1
          %s526 = smul.addr %s525, 8
          %s527 = scalar_lea.vmem [#allocation3], %s526
          %528 = dma.done %s524, 128
        $region56: #{tpu_custom_call.1} parent=51 // pred_fallthru
          _
      $region52: #{tpu_custom_call.1} parent=5 // pred_fallthru
        _
    $region6: #{tpu_custom_call.1} parent=1 // loop_footer
      %s17 = sadd.s32 1, %s13
    $region7: #{tpu_custom_call.1} parent=1 // loop_footer_branch
      %12 = sbr.rel target = $region3
    $region8: #{tpu_custom_call.1} parent=1 // loop_exit
      _
    %529 = vsyncpa [#allocation4], 1
    %s530 = scalar_lea.sflag [#allocation4], 1
    %531 = vsyncpa %s530, 1

</llo_original>
